<compile_context>
chip_gen: v7x
topology: tpu7x:2x2x1
jax: 0.10.0
libtpu: 0.0.40
codegen_flags: <defaults>
</compile_context>

<pallas_src>
import functools

import numpy as np
import jax
import jax.numpy as jnp
from jax.experimental import pallas as pl
from jax.experimental.pallas import tpu as pltpu


_DEFAULT_TILE = 512  # multiple of 128 -> lane-aligned adjacency tiles


def _tile_for(n, max_tile):
    """Return (padded_n, tile): full-extent block if small, else max_tile + pad."""
    if n <= max_tile:
        return n, n
    padded = ((n + max_tile - 1) // max_tile) * max_tile
    return padded, max_tile


def _pad_axis(x, target, axis):
    pad = target - x.shape[axis]
    if pad == 0:
        return x
    widths = [(0, 0)] * x.ndim
    widths[axis] = (0, pad)
    return jnp.pad(x, widths)


# -----------------------------------------------------------------------------
# Feature projection kernel:  xw = x @ w   (row-tiled, computed once / relation)
# -----------------------------------------------------------------------------
def _proj_kernel(x_ref, w_ref, o_ref):
    o_ref[...] = jnp.dot(x_ref[...], w_ref[...],
                         preferred_element_type=jnp.float32)


def _project(x, w, *, row_tile):
    # TODO(synk): in_feat is kept as a single full block; tile it too for very
    # wide input features.
    n_src, in_feat = x.shape
    out_feat = w.shape[1]
    assert n_src % row_tile == 0
    return pl.pallas_call(
        _proj_kernel,
        out_shape=jax.ShapeDtypeStruct((n_src, out_feat), jnp.float32),
        grid=(n_src // row_tile,),
        in_specs=[
            pl.BlockSpec((row_tile, in_feat), lambda i: (i, 0)),
            pl.BlockSpec((in_feat, out_feat), lambda i: (0, 0)),
        ],
        out_specs=pl.BlockSpec((row_tile, out_feat), lambda i: (i, 0)),
        compiler_params=pltpu.CompilerParams(
            dimension_semantics=("parallel",)),
    )(x, w)


# -----------------------------------------------------------------------------
# Fused SpMM + cross-relation aggregation kernel.
#   grid = (dst_tiles, relations, src_tiles)
#   rel_acc : running adj_tile @ xw_tile for the current relation (k reduction)
#   agg_acc : running cross-relation sum / max / min for the current dst tile
# -----------------------------------------------------------------------------
def _fused_spmm_agg_kernel(adj_ref, xw_ref, b_ref, out_ref, rel_acc, agg_acc,
                           *, agg, num_rel):
    r = pl.program_id(1)
    k = pl.program_id(2)
    nk = pl.num_programs(2)

    # init cross-relation accumulator once per dst tile
    @pl.when((r == 0) & (k == 0))
    def _():
        if agg == "max":
            agg_acc[...] = jnp.full_like(agg_acc, -jnp.inf)
        elif agg == "min":
            agg_acc[...] = jnp.full_like(agg_acc, jnp.inf)
        else:
            agg_acc[...] = jnp.zeros_like(agg_acc)

    # fresh per-relation accumulator at the start of each relation's k loop
    @pl.when(k == 0)
    def _():
        rel_acc[...] = jnp.zeros_like(rel_acc)

    # dense SpMM tile on the MXU, f32 accumulation (adjacency shipped as bf16)
    rel_acc[...] += jnp.dot(adj_ref[...].astype(jnp.float32), xw_ref[...],
                            preferred_element_type=jnp.float32)

    # relation finished: add its bias exactly once, fold into cross-type agg
    @pl.when(k == nk - 1)
    def _():
        rel_out = rel_acc[...] + b_ref[...]
        if agg in ("sum", "mean"):
            agg_acc[...] += rel_out
        elif agg == "max":
            agg_acc[...] = jnp.maximum(agg_acc[...], rel_out)
        else:  # "min"
            agg_acc[...] = jnp.minimum(agg_acc[...], rel_out)

    # all relations done for this dst tile: finalize + single store
    @pl.when((r == num_rel - 1) & (k == nk - 1))
    def _():
        res = agg_acc[...]
        if agg == "mean":
            res = res * (1.0 / num_rel)
        out_ref[...] = res.astype(out_ref.dtype)


def hetero_graphconv(relations, agg, *, max_tile_m=_DEFAULT_TILE,
                     max_tile_k=_DEFAULT_TILE, adj_dtype=jnp.bfloat16,
                     out_dtype=jnp.float32):
    """Fused per-dst-type HeteroGraphConv.

    relations: list of (adj (n_dst, n_src), x (n_src, in_feat),
                        w (in_feat, out_feat), b (1, out_feat)).
    Returns the aggregated (n_dst, out_feat) array for agg in
    {'sum', 'mean', 'max', 'min'}.
    """
    assert agg in ("sum", "mean", "max", "min")
    num_rel = len(relations)
    n_dst = relations[0][0].shape[0]
    out_feat = relations[0][2].shape[1]

    d_pad, tm = _tile_for(n_dst, max_tile_m)
    s_max = max(adj.shape[1] for adj, _, _, _ in relations)
    s_pad, tk = _tile_for(s_max, max_tile_k)

    adjs, xws, biases = [], [], []
    for adj, x, w, b in relations:
        # zero padding: padded src rows/cols contribute 0, padded dst rows are
        # sliced off after the call — exact.
        adj_p = _pad_axis(_pad_axis(adj, d_pad, 0), s_pad, 1).astype(adj_dtype)
        x_p = _pad_axis(x, s_pad, 0)
        xws.append(_project(x_p, w, row_tile=tk))        # (s_pad, out_feat) f32
        adjs.append(adj_p)
        biases.append(jnp.reshape(b, (1, out_feat)).astype(jnp.float32))
    adj_s = jnp.stack(adjs)                              # (R, d_pad, s_pad) bf16
    xw_s = jnp.stack(xws)                                # (R, s_pad, out_feat)
    b_s = jnp.stack(biases)                              # (R, 1, out_feat)

    grid = (d_pad // tm, num_rel, s_pad // tk)

    # VMEM budget: double-buffered tiles + the two f32 accumulators. Raise the
    # scoped-VMEM limit only when needed (v5e default is 16 MiB); cap well under
    # v7x's 64 MiB physical VMEM.
    adj_item = np.dtype(adj_dtype).itemsize
    vmem_need = (2 * (tm * tk * adj_item + tk * out_feat * 4 + out_feat * 4
                      + tm * out_feat * 4) + 2 * tm * out_feat * 4)
    cparams = dict(dimension_semantics=("parallel", "arbitrary", "arbitrary"))
    if vmem_need > 16 * 1024 * 1024:
        cparams["vmem_limit_bytes"] = min(int(1.5 * vmem_need), 48 * 1024 * 1024)

    out = pl.pallas_call(
        functools.partial(_fused_spmm_agg_kernel, agg=agg, num_rel=num_rel),
        out_shape=jax.ShapeDtypeStruct((d_pad, out_feat), out_dtype),
        grid=grid,
        in_specs=[
            pl.BlockSpec((None, tm, tk), lambda i, r, k: (r, i, k)),        # adj
            pl.BlockSpec((None, tk, out_feat), lambda i, r, k: (r, k, 0)),  # xw
            pl.BlockSpec((None, 1, out_feat), lambda i, r, k: (r, 0, 0)),   # bias
        ],
        out_specs=pl.BlockSpec((tm, out_feat), lambda i, r, k: (i, 0)),
        scratch_shapes=[pltpu.VMEM((tm, out_feat), jnp.float32),   # rel_acc
                        pltpu.VMEM((tm, out_feat), jnp.float32)],  # agg_acc
        compiler_params=pltpu.CompilerParams(**cparams),
        cost_estimate=pl.CostEstimate(
            flops=2 * num_rel * d_pad * s_pad * out_feat,
            transcendentals=0,
            bytes_accessed=(num_rel * d_pad * s_pad * adj_item
                            + num_rel * s_pad * out_feat * 4
                            + num_rel * out_feat * 4
                            + d_pad * out_feat * 4)),
    )(adj_s, xw_s, b_s)
    return out[:n_dst]


# -----------------------------------------------------------------------------
# HeteroGraphConv wrapper (Python glue around the fused Pallas kernel)
# -----------------------------------------------------------------------------
class HeteroGraphConvPallas:
    def __init__(self, mods, aggregate="sum", *, max_tile_m=_DEFAULT_TILE,
                 max_tile_k=_DEFAULT_TILE):
        # mods: dict etype -> (W (in_feat, out_feat), b (1, out_feat))
        self.mods = mods
        self.aggregate = aggregate
        self.max_tile_m = max_tile_m
        self.max_tile_k = max_tile_k

    def __call__(self, graph, inputs):
        """graph: dict (stype, etype, dtype) -> dense adjacency (n_dst, n_src).
        inputs: dict ntype -> node features (n_nodes, in_feat)."""
        per_dst = {}
        for (stype, etype, dtype), adj in graph.items():
            if adj.size == 0:          # number_of_edges() == 0
                continue
            if stype not in inputs:
                continue
            w, b = self.mods[etype]
            per_dst.setdefault(dtype, []).append((adj, inputs[stype], w, b))

        rsts = {}
        for nty, rels in per_dst.items():
            if self.aggregate == "stack":
                # torch.stack(outputs, dim=1): keep per-relation results separate
                outs = [hetero_graphconv([rel], "sum",
                                         max_tile_m=self.max_tile_m,
                                         max_tile_k=self.max_tile_k)
                        for rel in rels]
                rsts[nty] = jnp.stack(outs, axis=1)
            elif self.aggregate == "depth":
                # TODO(synk): 'depth' builds a fresh nn.Conv2d inside forward
                # (non-deterministic weights, pinned to cuda:1); not translated.
                raise NotImplementedError("'depth' aggregation is not translated")
            else:
                rsts[nty] = hetero_graphconv(rels, self.aggregate,
                                             max_tile_m=self.max_tile_m,
                                             max_tile_k=self.max_tile_k)
        return rsts


# -----------------------------------------------------------------------------
# Demo + checks
# -----------------------------------------------------------------------------
if __name__ == "__main__":
    key = jax.random.PRNGKey(0)
    keys = jax.random.split(key, 16)

    def make_params(k, fin, fout):
        kw, kb = jax.random.split(k)
        w = jax.random.normal(kw, (fin, fout), dtype=jnp.float32) * 0.1
        b = jax.random.normal(kb, (1, fout), dtype=jnp.float32) * 0.01
        return w, b

    def rel_ref(adj, x, w, b):
        return adj @ (x @ w) + b

    # ---- small heterogeneous demo (matches the PyTorch module semantics) ----
    n_user, n_item = 16, 16
    in_feat, out_feat = 32, 32
    x_user = jax.random.normal(keys[0], (n_user, in_feat), dtype=jnp.float32)
    x_item = jax.random.normal(keys[1], (n_item, in_feat), dtype=jnp.float32)
    inputs = {"user": x_user, "item": x_item}

    adj_follows = (jax.random.uniform(keys[2], (n_user, n_user)) < 0.3).astype(jnp.float32)
    adj_buys = (jax.random.uniform(keys[3], (n_item, n_user)) < 0.3).astype(jnp.float32)
    adj_bought = (jax.random.uniform(keys[4], (n_user, n_item)) < 0.3).astype(jnp.float32)
    graph = {
        ("user", "follows", "user"): adj_follows,
        ("user", "buys", "item"): adj_buys,
        ("item", "bought-by", "user"): adj_bought,
    }
    mods = {
        "follows": make_params(keys[5], in_feat, out_feat),
        "buys": make_params(keys[6], in_feat, out_feat),
        "bought-by": make_params(keys[7], in_feat, out_feat),
    }

    u1 = rel_ref(adj_follows, x_user, *mods["follows"])
    u2 = rel_ref(adj_bought, x_item, *mods["bought-by"])
    i1 = rel_ref(adj_buys, x_user, *mods["buys"])

    # sum
    rsts = HeteroGraphConvPallas(mods, aggregate="sum")(graph, inputs)
    rsts = jax.tree_util.tree_map(jax.block_until_ready, rsts)
    assert rsts["user"].shape == (n_user, out_feat)
    assert rsts["item"].shape == (n_item, out_feat)
    assert jnp.allclose(rsts["user"], u1 + u2, atol=1e-4)
    assert jnp.allclose(rsts["item"], i1, atol=1e-4)

    # mean
    rsts_mean = HeteroGraphConvPallas(mods, aggregate="mean")(graph, inputs)
    assert jnp.allclose(rsts_mean["user"], 0.5 * (u1 + u2), atol=1e-4)

    # max
    rsts_max = HeteroGraphConvPallas(mods, aggregate="max")(graph, inputs)
    assert jnp.allclose(rsts_max["user"], jnp.maximum(u1, u2), atol=1e-4)

    # stack
    rsts_stack = HeteroGraphConvPallas(mods, aggregate="stack")(graph, inputs)
    assert rsts_stack["user"].shape == (n_user, 2, out_feat)
    assert jnp.allclose(rsts_stack["user"], jnp.stack([u1, u2], axis=1), atol=1e-4)

    # ---- larger case exercising tiling, padding and the k-reduction path ----
    n_a, n_b = 320, 192          # padded to 384 with 128-wide tiles
    fin, fout = 128, 128         # lane-dense feature dims
    xa = jax.random.normal(keys[8], (n_a, fin), dtype=jnp.float32)
    xb = jax.random.normal(keys[9], (n_b, fin), dtype=jnp.float32)
    adj_aa = (jax.random.uniform(keys[10], (n_a, n_a)) < 0.1).astype(jnp.float32)
    adj_ba = (jax.random.uniform(keys[11], (n_a, n_b)) < 0.1).astype(jnp.float32)
    big_graph = {("a", "self", "a"): adj_aa, ("b", "to_a", "a"): adj_ba}
    big_inputs = {"a": xa, "b": xb}
    big_mods = {"self": make_params(keys[12], fin, fout),
                "to_a": make_params(keys[13], fin, fout)}

    big = HeteroGraphConvPallas(big_mods, aggregate="sum",
                                max_tile_m=128, max_tile_k=128)(big_graph, big_inputs)
    big = jax.tree_util.tree_map(jax.block_until_ready, big)
    ref_big = (rel_ref(adj_aa, xa, *big_mods["self"])
               + rel_ref(adj_ba, xb, *big_mods["to_a"]))
    assert big["a"].shape == (n_a, fout)
    rel_err = jnp.max(jnp.abs(big["a"] - ref_big)) / (jnp.max(jnp.abs(ref_big)) + 1e-6)
    assert rel_err < 3e-2, f"relative error too large: {rel_err}"

    print("KERNEL_OK")
</pallas_src>

<mosaic_0001>
module attributes {stable_mosaic.version = 11 : i64} {
  func.func @_proj_kernel(%arg0: i32, %arg1: memref<16x32xf32, #tpu.memory_space<vmem>>, %arg2: memref<32x32xf32, #tpu.memory_space<vmem>>, %arg3: memref<16x32xf32, #tpu.memory_space<vmem>>) attributes {dimension_semantics = [#tpu.dimension_semantics<parallel>], iteration_bounds = array<i64: 1>, scalar_prefetch = 0 : i64, scratch_operands = 0 : i64, tpu.core_type = #tpu.core_type<tc>, window_params = [{transform_indices = @transform_0, window_bounds = array<i64: 16, 32>}, {pipeline_mode = #tpu.pipeline_mode<synchronous>, transform_indices = @transform_1, window_bounds = array<i64: 32, 32>}, {transform_indices = @transform_2, window_bounds = array<i64: 16, 32>}]} {
    %c0 = arith.constant 0 : index
    %c0_0 = arith.constant 0 : index
    %0 = vector.load %arg1[%c0, %c0_0] : memref<16x32xf32, #tpu.memory_space<vmem>>, vector<16x32xf32>
    %c0_1 = arith.constant 0 : index
    %c0_2 = arith.constant 0 : index
    %1 = vector.load %arg2[%c0_1, %c0_2] : memref<32x32xf32, #tpu.memory_space<vmem>>, vector<32x32xf32>
    %cst = arith.constant dense<0.000000e+00> : vector<16x32xf32>
    %2 = tpu.matmul %0, %1, %cst {dimension_numbers = #tpu.dot_dimension_numbers<[1], [0], [0], [1], [0, 0, 1, 1], [], []>} : vector<16x32xf32>, vector<32x32xf32>, vector<16x32xf32> -> vector<16x32xf32>
    %c0_3 = arith.constant 0 : index
    %c0_4 = arith.constant 0 : index
    %3 = vector.load %arg3[%c0_3, %c0_4] : memref<16x32xf32, #tpu.memory_space<vmem>>, vector<16x32xf32>
    tpu.vector_store %arg3[%c0_3, %c0_4], %2 {strides = array<i32>} : memref<16x32xf32, #tpu.memory_space<vmem>>, vector<16x32xf32>,
    return
  }
  func.func @transform_0(%arg0: i32) -> (i32, i32) {
    %c0_i32 = arith.constant 0 : i32
    %c0_i32_0 = arith.constant 0 : i32
    return %arg0, %c0_i32 : i32, i32
  }
  func.func @transform_1(%arg0: i32) -> (i32, i32) {
    %c0_i32 = arith.constant 0 : i32
    %c0_i32_0 = arith.constant 0 : i32
    %c0_i32_1 = arith.constant 0 : i32
    return %c0_i32, %c0_i32_0 : i32, i32
  }
  func.func @transform_2(%arg0: i32) -> (i32, i32) {
    %c0_i32 = arith.constant 0 : i32
    %c0_i32_0 = arith.constant 0 : i32
    return %arg0, %c0_i32 : i32, i32
  }
}

</mosaic_0001>

<llo_original>
// kernel: tpu_custom_call.1
$region0: #{tpu_custom_call.1}
  #allocation0 [shape = 'u32[]', space=smem, size = 0x4, offset = 0x4, fixed_abs, tag = 'smem constant byte address 0x4 - core index']
  #allocation1 [shape = 'u32[144,128]{1,0:T(1,128)}', space=vmem, size = 0x12000, scoped, tag = 'internal scratch']
  %s0 = inlined_call_operand.hbm [shape: f32[16,32], index: 0, kind: input, shape index: {}]
  %s1 = inlined_call_operand.hbm [shape: f32[32,32], index: 1, kind: input, shape index: {}]
  %s2 = inlined_call_operand.hbm [shape: f32[16,32], index: 2, kind: output, shape index: {}]
  %s3 = sld [smem:[#allocation0]]
  $region26: #{tpu_custom_call.1} parent=0
    _
  %s5 = ssub.s32 1, %s3
  %s6 = scalar_select 0, %s5, %s3
  $region1: #{tpu_custom_call.1} parent=0
    #allocation2 [shape = 'u8[8192]{0}', space=vmem, size = 0x2000, scoped, tag = 'input window, operand 0, single buffered']
    #allocation3 [shape = 's32[1]{0}', space=sflag, size = 0x4, scoped, tag = 'scoped memory for tpu_custom_call.1']
    #allocation4 [shape = 's32[1]{0}', space=sflag, size = 0x4, scoped, tag = 'scoped memory for tpu_custom_call.1']
    #allocation5 [shape = 'u8[16384]{0}', space=vmem, size = 0x4000, scoped, tag = 'input window, operand 1, single buffered']
    #allocation6 [shape = 's32[1]{0}', space=sflag, size = 0x4, scoped, tag = 'scoped memory for tpu_custom_call.1']
    #allocation7 [shape = 'u8[8192]{0}', space=vmem, size = 0x2000, scoped, tag = 'output window, operand 0, single buffered']
    %7 = vsyncpa [#allocation3], 0
    %8 = vsyncpa [#allocation6], 0
    %9 = vsyncpa [#allocation4], 0
    // Predicated region
    $region2: #{tpu_custom_call.1} parent=1 // pred_check
      _
    $region3: #{tpu_custom_call.1} parent=1 // pred_check_branch
      %11 = sbr.rel (0) target = $region5
    $region4: #{tpu_custom_call.1} parent=1 // pred_region
      %s13 = ssub.s32 256, 256
      %14 = vsyncadd [#allocation3], %s13
      %s15 = sshll.u32 [#allocation2], 4
      %s16 = int_to_ptr.vmem [resolvable:$true] %s15
      %21 = dma.hbm_to_vmem [thread:$0]  %s0, 256, %s16, [#allocation3], 128, 128, 8
    $region5: #{tpu_custom_call.1} parent=1 // pred_fallthru
      _
    // Predicated region
    $region6: #{tpu_custom_call.1} parent=1 // pred_check
      _
    $region7: #{tpu_custom_call.1} parent=1 // pred_check_branch
      %23 = sbr.rel (0) target = $region9
    $region8: #{tpu_custom_call.1} parent=1 // pred_region
      %s25 = ssub.s32 512, 512
      %26 = vsyncadd [#allocation6], %s25
      %s27 = sshll.u32 [#allocation5], 4
      %s28 = int_to_ptr.vmem [resolvable:$true] %s27
      %33 = dma.hbm_to_vmem [thread:$0]  %s1, 512, %s28, [#allocation6], 128, 128, 8
    $region9: #{tpu_custom_call.1} parent=1 // pred_fallthru
      _
    // Predicated region
    $region10: #{tpu_custom_call.1} parent=1 // pred_check
      _
    $region11: #{tpu_custom_call.1} parent=1 // pred_check_branch
      %35 = sbr.rel (0) target = $region13
    $region12: #{tpu_custom_call.1} parent=1 // pred_region
      %36 = dma.done [#allocation3], 256
    $region13: #{tpu_custom_call.1} parent=1 // pred_fallthru
      _
    // Predicated region
    $region14: #{tpu_custom_call.1} parent=1 // pred_check
      _
    $region15: #{tpu_custom_call.1} parent=1 // pred_check_branch
      %38 = sbr.rel (0) target = $region17
    $region16: #{tpu_custom_call.1} parent=1 // pred_region
      %39 = dma.done [#allocation6], 512
    $region17: #{tpu_custom_call.1} parent=1 // pred_fallthru
      _
    %v40 = vld [vmem:[#allocation2] sm:$0xff]
    %v41 = vld [vmem:[#allocation2 + $0x8] sm:$0xff]
    %v42 = vld [vmem:[#allocation5] sm:$0xff]
    %v43 = vld [vmem:[#allocation5 + $0x8] sm:$0xff]
    %v44 = vld [vmem:[#allocation5 + $0x10] sm:$0xff]
    %v45 = vld [vmem:[#allocation5 + $0x18] sm:$0xff]
    %vm46 = vcmask 261120
    %v48 = vsel %vm46, %v40, 0
    %v51 = vsel %vm46, %v41, 0
    %53 = vmatprep.subr.mxu0 0.0
    %54 = vmatpush1.msra.mxu0 %v42
    %55 = vmatprep.subr.mxu0 0.0
    %56 = vmatpush1.msra.mxu0 %v43
    %57 = vmatprep.subr.mxu0 0.0
    %58 = vmatpush1.msra.mxu0 %v44
    %59 = vmatprep.subr.mxu0 0.0
    %60 = vmatpush1.msra.mxu0 %v45
    %61 = vmatprep.subr.mxu0 0.0
    %62 = vmatpush1.msra.mxu0 0.0
    %63 = vmatprep.subr.mxu0 0.0
    %64 = vmatpush1.msra.mxu0 0.0
    %65 = vmatprep.subr.mxu0 0.0
    %66 = vmatpush1.msra.mxu0 0.0
    %67 = vmatprep.subr.mxu0 0.0
    %68 = vmatpush1.msra.mxu0 0.0
    %69 = vmatprep.subr.mxu0 0.0
    %70 = vmatpush1.msra.mxu0 0.0
    %71 = vmatprep.subr.mxu0 0.0
    %72 = vmatpush1.msra.mxu0 0.0
    %73 = vmatprep.subr.mxu0 0.0
    %74 = vmatpush1.msra.mxu0 0.0
    %75 = vmatprep.subr.mxu0 0.0
    %76 = vmatpush1.msra.mxu0 0.0
    %77 = vmatprep.subr.mxu0 0.0
    %78 = vmatpush1.msra.mxu0 0.0
    %79 = vmatprep.subr.mxu0 0.0
    %80 = vmatpush1.msra.mxu0 0.0
    %81 = vmatprep.subr.mxu0 0.0
    %82 = vmatpush1.msra.mxu0 0.0
    %83 = vmatprep.subr.mxu0 0.0
    %84 = vmatpush1.msra.mxu0 0.0
    %85 = vmatprep.subr.mxu0 0.0
    %86 = vmatpush1.msra.mxu0 0.0
    %87 = vmatprep.subr.mxu0 0.0
    %88 = vmatpush1.msra.mxu0 0.0
    %89 = vmatprep.subr.mxu0 0.0
    %90 = vmatpush1.msra.mxu0 0.0
    %91 = vmatprep.subr.mxu0 0.0
    %92 = vmatpush1.msra.mxu0 0.0
    %93 = vmatprep.subr.mxu0 0.0
    %94 = vmatpush1.msra.mxu0 0.0
    %95 = vmatprep.subr.mxu0 0.0
    %96 = vmatpush1.msra.mxu0 0.0
    %97 = vmatprep.subr.mxu0 0.0
    %98 = vmatpush1.msra.mxu0 0.0
    %99 = vmatprep.subr.mxu0 0.0
    %100 = vmatpush1.msra.mxu0 0.0
    %101 = vmatprep.subr.mxu0 0.0
    %102 = vmatpush1.msra.mxu0 0.0
    %103 = vmatprep.subr.mxu0 0.0
    %104 = vmatpush1.msra.mxu0 0.0
    %105 = vmatprep.subr.mxu0 0.0
    %106 = vmatpush1.msra.mxu0 0.0
    %107 = vmatprep.subr.mxu0 0.0
    %108 = vmatpush1.msra.mxu0 0.0
    %109 = vmatprep.subr.mxu0 0.0
    %110 = vmatpush1.msra.mxu0 0.0
    %111 = vmatprep.subr.mxu0 0.0
    %112 = vmatpush1.msra.mxu0 0.0
    %113 = vmatprep.subr.mxu0 0.0
    %114 = vmatpush1.msra.mxu0 0.0
    %115 = vmatprep.subr.mxu0 0.0
    %116 = vmatpush1.msra.mxu0 0.0
    %117 = vmatprep.mubr.f32.mxu0 0.0
    %118 = vmatmul.mubr.f32.gmra.mrb[0].mxu0 %v48
    %v119 = vpop.f32.mrb[0].mxu0
    %v120 = vadd.f32 0.0, %v119
    %v121 = vpop.f32.mrb[0].mxu0
    %122 = vmatprep.mubr.f32.mxu0 0.0
    %123 = vmatmul.mubr.f32.gmra.mrb[0].mxu0 %v51
    %v124 = vpop.f32.mrb[0].mxu0
    %v125 = vadd.f32 0.0, %v124
    %v126 = vpop.f32.mrb[0].mxu0
    %127 = vdwg.mxu0
    %128 = vst.msk [vmem:[#allocation7] sm:$0xff] %vm46, %v120
    %129 = vst.msk [vmem:[#allocation7 + $0x8] sm:$0xff] %vm46, %v125
    // Predicated region
    $region18: #{tpu_custom_call.1} parent=1 // pred_check
      _
    $region19: #{tpu_custom_call.1} parent=1 // pred_check_branch
      %131 = sbr.rel (0) target = $region21
    $region20: #{tpu_custom_call.1} parent=1 // pred_region
      %s133 = ssub.s32 256, 256
      %134 = vsyncadd [#allocation4], %s133
      %s135 = sshll.u32 [#allocation7], 4
      %s136 = int_to_ptr.vmem [resolvable:$true] %s135
      %141 = dma.vmem_to_hbm [thread:$0]  %s136, 256, %s2, [#allocation4], 128, 128, 8
    $region21: #{tpu_custom_call.1} parent=1 // pred_fallthru
      _
    // Predicated region
    $region22: #{tpu_custom_call.1} parent=1 // pred_check
      _
    $region23: #{tpu_custom_call.1} parent=1 // pred_check_branch
      %143 = sbr.rel (0) target = $region25
    $region24: #{tpu_custom_call.1} parent=1 // pred_region
      %144 = dma.done [#allocation4], 256
    $region25: #{tpu_custom_call.1} parent=1 // pred_fallthru
      _
    %145 = vsyncpa [#allocation3], 1
    %146 = vsyncpa [#allocation6], 1
    %147 = vsyncpa [#allocation4], 1

</llo_original>
